<compile_context>
chip_gen: v5e
topology: v5e:2x2
jax: 0.10.0
libtpu: 0.0.40
codegen_flags: <defaults>
</compile_context>

<pallas_src>
import math

import jax
import jax.numpy as jnp
from jax.experimental import pallas as pl
from jax.experimental.pallas import tpu as pltpu


def _rope_kernel(q_ref, cos_ref, sin_ref, o_ref):
    # q_ref/o_ref: (tS, D) block of one batch; cos_ref/sin_ref: (tS, D) tables.
    x = q_ref[...].astype(jnp.float32)
    cos = cos_ref[...].astype(jnp.float32)
    sin_signed = sin_ref[...].astype(jnp.float32)   # sign folded in on the host
    D = x.shape[-1]

    # lane parity == original even/odd feature index
    lane = jax.lax.broadcasted_iota(jnp.int32, x.shape, dimension=1)
    is_even = (lane & 1) == 0

    # x_plus[l] = x[l+1] (roll by D-1); x_minus[l] = x[l-1] (roll by 1).
    # Wrapped lanes (0 and D-1) are never selected by the parity mask.
    x_plus = pltpu.roll(x, shift=D - 1, axis=1)
    x_minus = pltpu.roll(x, shift=1, axis=1)
    x2 = jnp.where(is_even, x_plus, x_minus)

    o_ref[...] = (x * cos + x2 * sin_signed).astype(o_ref.dtype)
    # TODO(synk): optional bf16-VPU / packed-u32-rotate variant for v6e/v7x if a
    # bundle profile ever shows the vector slots binding at very large tiles.


def make_rope_tables(max_position, embedding_size, dtype=jnp.float32):
    """Build RoPE tables once, in the activation dtype.

    Returns (cos_position, sin_signed, sin_position):
      * cos_position / sin_position match the PyTorch module buffers.
      * sin_signed has the rotation sign (-sin on even feature lanes) folded in,
        which is what the kernel consumes (no per-call where/astype pass).
    """
    position = jnp.arange(max_position, dtype=jnp.float32)[:, None]             # [P, 1]
    div_term = jnp.exp(
        jnp.arange(0, embedding_size, 2, dtype=jnp.float32)
        * (-math.log(10000.0) / embedding_size)
    )                                                                            # [D/2]
    ang = position * div_term                                                    # [P, D/2]
    cos_position = jnp.repeat(jnp.cos(ang), 2, axis=-1)                          # [P, D]
    sin_position = jnp.repeat(jnp.sin(ang), 2, axis=-1)                          # [P, D]
    even_lane = (jnp.arange(embedding_size) & 1) == 0
    sin_signed = jnp.where(even_lane[None, :], -sin_position, sin_position)
    return (cos_position.astype(dtype),
            sin_signed.astype(dtype),
            sin_position.astype(dtype))


def _vmem_budget_bytes():
    """Per-generation VMEM budget (leave headroom below physical capacity)."""
    phys = None
    try:
        info = pltpu.get_tpu_info()
        for name in ("vmem_capacity_bytes", "vmem_bytes", "vmem_size_bytes"):
            phys = getattr(info, name, None)
            if phys:
                break
    except Exception:
        phys = None
    if not phys:
        phys = 64 * 1024 * 1024          # conservative (v7x-sized) fallback
    # ~3/4 of physical, capped at 96 MiB (v5e/v6e: 96 MiB; v7x: 48 MiB).
    return int(min(int(phys) * 3 // 4, 96 * 1024 * 1024))


def _choose_row_tile(S, D, qw_itemsize, table_itemsize, vmem_budget,
                     target_block_bytes=8 * 1024 * 1024):
    """Largest row tile whose full double-buffered footprint fits the budget."""
    # Per row of a block, double-buffered:
    #   2 buffers x (qw block + out block in qw dtype, cos + sin in table dtype)
    per_row = 2 * D * (2 * qw_itemsize + 2 * table_itemsize)
    max_rows_vmem = max(1, int(vmem_budget * 0.85) // per_row)
    max_rows_tgt = max(1, target_block_bytes // max(1, D * qw_itemsize))
    max_rows = min(max_rows_vmem, max_rows_tgt)
    if max_rows >= S:
        return S                          # single tile over rows
    tS = (max_rows // 8) * 8              # second-to-last block dim must be /8
    if tS < 8:
        tS = min(8, S)
    return tS


def rope_position_encoding(qw, cos_position, sin_signed):
    """qw: [B, S, D]. Applies RoPE along seq_dim=-2 (matches the PyTorch forward).

    `sin_signed` is the sign-folded sin table from make_rope_tables.
    """
    B, S, D = qw.shape
    assert D % 2 == 0, "RoPE requires an even embedding size"
    P = cos_position.shape[0]
    assert S <= P, "sequence length exceeds max_position"

    qw_itemsize = jnp.dtype(qw.dtype).itemsize
    tbl_itemsize = jnp.dtype(cos_position.dtype).itemsize

    budget = _vmem_budget_bytes()
    tS = _choose_row_tile(S, D, qw_itemsize, tbl_itemsize, budget)
    num_row_tiles = pl.cdiv(S, tS)

    # Corner case: a single full-S tile with S not a multiple of 8 would make
    # the (tS, D) table block violate the sublane rule against the (P, D)
    # tables.  Slice once (tiny copy) so the block equals the full table dims.
    if tS == S and (S % 8 != 0) and (S != P):
        cos_position = cos_position[:S]
        sin_signed = sin_signed[:S]

    # Row axis outermost: shard it across v7x's two TensorCores when possible so
    # each cos/sin block is DMA'd by exactly one core; batch innermost keeps the
    # tables VMEM-resident across the batch loop.
    if num_row_tiles >= 2:
        dim_sem = ("parallel", "arbitrary")
    else:
        dim_sem = ("parallel", "parallel")

    cost = pl.CostEstimate(
        flops=int(3 * B * S * D),
        transcendentals=0,
        bytes_accessed=int(2 * B * S * D * qw_itemsize + 2 * S * D * tbl_itemsize),
    )

    out = pl.pallas_call(
        _rope_kernel,
        out_shape=jax.ShapeDtypeStruct((B, S, D), qw.dtype),
        grid=(num_row_tiles, B),
        in_specs=[
            pl.BlockSpec((None, tS, D), lambda s, b: (b, s, 0)),   # qw (batch squeezed)
            pl.BlockSpec((tS, D), lambda s, b: (s, 0)),            # cos
            pl.BlockSpec((tS, D), lambda s, b: (s, 0)),            # signed sin
        ],
        out_specs=pl.BlockSpec((None, tS, D), lambda s, b: (b, s, 0)),
        compiler_params=pltpu.CompilerParams(
            dimension_semantics=dim_sem,
            vmem_limit_bytes=budget,
        ),
        cost_estimate=cost,
    )(qw, cos_position, sin_signed)

    return out


def rope_reference(qw, cos_position, sin_position):
    """Pure-JAX reference mirroring the PyTorch forward (unsigned sin table)."""
    S = qw.shape[-2]
    cos = cos_position[:S].astype(jnp.float32)
    sin = sin_position[:S].astype(jnp.float32)
    x = qw.astype(jnp.float32)
    x_even = x[..., 0::2]
    x_odd = x[..., 1::2]
    x2 = jnp.stack([-x_odd, x_even], axis=-1).reshape(x.shape)
    return (x * cos + x2 * sin).astype(qw.dtype)


if __name__ == "__main__":
    B, S, D = 2, 8, 32
    MAX_POSITION = 16

    key = jax.random.PRNGKey(0)
    qw = jax.random.normal(key, (B, S, D), dtype=jnp.float32)

    cos_position, sin_signed, sin_position = make_rope_tables(
        MAX_POSITION, D, dtype=qw.dtype)

    out = rope_position_encoding(qw, cos_position, sin_signed)
    out = jax.block_until_ready(out)

    ref = rope_reference(qw, cos_position, sin_position)
    assert out.shape == qw.shape and out.dtype == qw.dtype
    assert jnp.allclose(out, ref, atol=1e-5, rtol=1e-5), "mismatch vs reference"

    print("KERNEL_OK")
</pallas_src>

<mosaic_0001>
module attributes {stable_mosaic.version = 11 : i64} {
  func.func @_rope_kernel(%arg0: i32, %arg1: i32, %arg2: memref<1x8x32xf32, #tpu.memory_space<vmem>>, %arg3: memref<8x32xf32, #tpu.memory_space<vmem>>, %arg4: memref<8x32xf32, #tpu.memory_space<vmem>>, %arg5: memref<1x8x32xf32, #tpu.memory_space<vmem>>) attributes {dimension_semantics = [#tpu.dimension_semantics<parallel>, #tpu.dimension_semantics<parallel>], iteration_bounds = array<i64: 1, 2>, scalar_prefetch = 0 : i64, scratch_operands = 0 : i64, tpu.core_type = #tpu.core_type<tc>, window_params = [{transform_indices = @transform_0, window_bounds = array<i64: 1, 8, 32>}, {transform_indices = @transform_1, window_bounds = array<i64: 8, 32>}, {transform_indices = @transform_2, window_bounds = array<i64: 8, 32>}, {transform_indices = @transform_3, window_bounds = array<i64: 1, 8, 32>}]} {
    %c0 = arith.constant 0 : index
    %c0_0 = arith.constant 0 : index
    %c0_1 = arith.constant 0 : index
    %0 = vector.load %arg2[%c0, %c0_0, %c0_1] : memref<1x8x32xf32, #tpu.memory_space<vmem>>, vector<1x8x32xf32>
    %1 = vector.shape_cast %0 : vector<1x8x32xf32> to vector<8x32xf32>
    %c0_2 = arith.constant 0 : index
    %c0_3 = arith.constant 0 : index
    %2 = vector.load %arg3[%c0_2, %c0_3] : memref<8x32xf32, #tpu.memory_space<vmem>>, vector<8x32xf32>
    %c0_4 = arith.constant 0 : index
    %c0_5 = arith.constant 0 : index
    %3 = vector.load %arg4[%c0_4, %c0_5] : memref<8x32xf32, #tpu.memory_space<vmem>>, vector<8x32xf32>
    %4 = tpu.iota {dimensions = array<i32: 1>} : vector<8x32xi32>
    %c1_i32 = arith.constant 1 : i32
    %5 = vector.broadcast %c1_i32 : i32 to vector<8x32xi32>
    %6 = arith.andi %4, %5 : vector<8x32xi32>
    %c0_i32 = arith.constant 0 : i32
    %7 = vector.broadcast %c0_i32 : i32 to vector<8x32xi32>
    %8 = arith.cmpi eq, %6, %7 : vector<8x32xi32>
    %c31_i32 = arith.constant 31 : i32
    %9 = tpu.dynamic_rotate %1 by %c31_i32 dim 1 : vector<8x32xf32>, i32 -> vector<8x32xf32>
    %c1_i32_6 = arith.constant 1 : i32
    %10 = tpu.dynamic_rotate %1 by %c1_i32_6 dim 1 : vector<8x32xf32>, i32 -> vector<8x32xf32>
    %11 = arith.select %8, %9, %10 : vector<8x32xi1>, vector<8x32xf32>
    %12 = arith.mulf %1, %2 : vector<8x32xf32>
    %13 = arith.mulf %11, %3 : vector<8x32xf32>
    %14 = arith.addf %12, %13 : vector<8x32xf32>
    %c0_7 = arith.constant 0 : index
    %c0_8 = arith.constant 0 : index
    %c0_9 = arith.constant 0 : index
    %15 = vector.load %arg5[%c0_7, %c0_8, %c0_9] : memref<1x8x32xf32, #tpu.memory_space<vmem>>, vector<1x8x32xf32>
    %16 = vector.shape_cast %15 : vector<1x8x32xf32> to vector<8x32xf32>
    %17 = vector.shape_cast %14 : vector<8x32xf32> to vector<1x8x32xf32>
    tpu.vector_store %arg5[%c0_7, %c0_8, %c0_9], %17 {strides = array<i32>} : memref<1x8x32xf32, #tpu.memory_space<vmem>>, vector<1x8x32xf32>,
    return
  }
  func.func @transform_0(%arg0: i32, %arg1: i32) -> (i32, i32, i32) {
    %c0_i32 = arith.constant 0 : i32
    %c0_i32_0 = arith.constant 0 : i32
    return %arg1, %arg0, %c0_i32 : i32, i32, i32
  }
  func.func @transform_1(%arg0: i32, %arg1: i32) -> (i32, i32) {
    %c0_i32 = arith.constant 0 : i32
    %c0_i32_0 = arith.constant 0 : i32
    return %arg0, %c0_i32 : i32, i32
  }
  func.func @transform_2(%arg0: i32, %arg1: i32) -> (i32, i32) {
    %c0_i32 = arith.constant 0 : i32
    %c0_i32_0 = arith.constant 0 : i32
    return %arg0, %c0_i32 : i32, i32
  }
  func.func @transform_3(%arg0: i32, %arg1: i32) -> (i32, i32, i32) {
    %c0_i32 = arith.constant 0 : i32
    %c0_i32_0 = arith.constant 0 : i32
    return %arg1, %arg0, %c0_i32 : i32, i32, i32
  }
}

</mosaic_0001>

<llo_original>
// kernel: tpu_custom_call.1
$region0: #{tpu_custom_call.1}
  #allocation0 [shape = 'u32[]', space=smem, size = 0x4, offset = 0x4, fixed_abs, tag = 'smem constant byte address 0x4 - core index']
  #allocation1 [shape = 'u32[72,128]{1,0:T(1,128)}', space=vmem, size = 0x9000, scoped, tag = 'internal scratch']
  %s0 = inlined_call_operand.hbm [shape: f32[2,8,32], index: 0, kind: input, shape index: {}]
  %s1 = inlined_call_operand.hbm [shape: f32[16,32], index: 1, kind: input, shape index: {}]
  %s2 = inlined_call_operand.hbm [shape: f32[16,32], index: 2, kind: input, shape index: {}]
  %s3 = inlined_call_operand.hbm [shape: f32[2,8,32], index: 3, kind: output, shape index: {}]
  %s4 = sld [smem:[#allocation0]]
  $region57: #{tpu_custom_call.1} parent=0
    _
  %s6 = ssub.s32 1, %s4
  %s7 = scalar_select 0, %s6, %s4
  $region1: #{tpu_custom_call.1} parent=0
    #allocation2 [shape = 'u8[8192]{0}', space=vmem, size = 0x2000, scoped, tag = 'input window, operand 0']
    #allocation3 [shape = 's32[2]{0}', space=sflag, size = 0x8, scoped, tag = 'scoped memory for tpu_custom_call.1']
    #allocation4 [shape = 's32[2]{0}', space=sflag, size = 0x8, scoped, tag = 'scoped memory for tpu_custom_call.1']
    #allocation5 [shape = 'u8[4096]{0}', space=vmem, size = 0x1000, scoped, tag = 'input window, operand 1, single buffered']
    #allocation6 [shape = 's32[1]{0}', space=sflag, size = 0x4, scoped, tag = 'scoped memory for tpu_custom_call.1']
    #allocation7 [shape = 'u8[4096]{0}', space=vmem, size = 0x1000, scoped, tag = 'input window, operand 2, single buffered']
    #allocation8 [shape = 'u8[8192]{0}', space=vmem, size = 0x2000, scoped, tag = 'output window, operand 0']
    %8 = vsyncpa [#allocation3], 0
    %s9 = scalar_lea.sflag [#allocation3], 1
    %10 = vsyncpa %s9, 0
    %11 = vsyncpa [#allocation6], 0
    %12 = vsyncpa [#allocation4], 0
    %s13 = scalar_lea.sflag [#allocation4], 1
    %14 = vsyncpa %s13, 0
    loop: start=0, step=1, limit=4
    $region2: #{tpu_custom_call.1} parent=1 // loop_pre_header
      _
    $region3: #{tpu_custom_call.1} parent=1 // loop_header
      %s16 = sphi 0, %s20
      %p17 = scmp.ge.s32.totalorder %s16, 4
      %s23 = sphi 0, %s35
      %s24 = sphi 0, %s31
      %s25 = sphi 0, %s23
      %s26 = sphi 0, %s24
      %s27 = sphi 0, %s25
      %s28 = sphi 0, %s26
      %s40 = sphi 0, %s42
      %s43 = sphi 0, %s40
      %s44 = sphi 0, %s43
      %s60 = sphi 0, %s44
      %s66 = sphi 0, %s68
      %s69 = sphi 0, %s66
      %s70 = sphi 0, %s69
      %s86 = sphi 0, %s70
      %s92 = sphi 0, %s94
      %s95 = sphi 0, %s92
      %s96 = sphi 0, %s95
      %s112 = sphi 0, %s96
      %s120 = sphi 0, %s122
      %s123 = sphi 0, %s120
      %s124 = sphi 0, %s123
      %s140 = sphi 0, %s124
    $region4: #{tpu_custom_call.1} parent=1 // loop_header_branch
      %19 = sbr.rel (%p17) target = $region8
    $region5: #{tpu_custom_call.1} parent=1 // loop_body
      %s21 = ssub.s32 %s16, 1
      %s22 = ssub.s32 %s16, 2
      %s29 = sadd.s32 1, %s24
      %p30 = scmp.ge.s32.totalorder %s29, 2
      %s31 = scalar_select %p30, 0, %s29
      %s32 = sadd.s32 1, %s23
      %s33 = scalar_select %p30, %s32, %s23
      %p34 = scmp.ge.s32.totalorder %s33, 1
      %s35 = scalar_select %p34, 0, %s33
      %s36 = ssub.s32 %s24, %s31
      %s37 = ssub.s32 %s23, %s35
      %s38 = sor.u32 %s36, %s37
      %p39 = scmp.eq.s32.totalorder %s38, 0
      %s41 = sadd.s32 %s40, 1
      %s42 = scalar_select %p39, %s40, %s41
      %p45 = pneg %p39
      %p46 = scmp.eq.s32.totalorder %s16, 1
      %p47 = por %p45, %p46
      %p48 = scmp.ne.s32.totalorder %s40, %s43
      %p49 = scmp.eq.s32.totalorder %s16, 0
      %p50 = por %p48, %p49
      %p51 = scmp.ne.s32.totalorder %s40, %s43
      %p52 = scmp.eq.s32.totalorder %s21, 1
      %p53 = por %p51, %p52
      %p54 = scmp.ne.s32.totalorder %s43, %s44
      %p55 = scmp.eq.s32.totalorder %s21, 0
      %p56 = por %p54, %p55
      %p57 = scmp.ne.s32.totalorder %s43, %s44
      %p58 = scmp.eq.s32.totalorder %s22, 1
      %p59 = por %p57, %p58
      %p61 = scmp.ne.s32.totalorder %s44, %s60
      %p62 = scmp.eq.s32.totalorder %s22, 0
      %p63 = por %p61, %p62
      %s64 = ssub.s32 %s23, %s35
      %p65 = scmp.eq.s32.totalorder %s64, 0
      %s67 = sadd.s32 %s66, 1
      %s68 = scalar_select %p65, %s66, %s67
      %p71 = pneg %p65
      %p72 = scmp.eq.s32.totalorder %s16, 1
      %p73 = por %p71, %p72
      %p74 = scmp.ne.s32.totalorder %s66, %s69
      %p75 = scmp.eq.s32.totalorder %s16, 0
      %p76 = por %p74, %p75
      %p77 = scmp.ne.s32.totalorder %s66, %s69
      %p78 = scmp.eq.s32.totalorder %s21, 1
      %p79 = por %p77, %p78
      %p80 = scmp.ne.s32.totalorder %s69, %s70
      %p81 = scmp.eq.s32.totalorder %s21, 0
      %p82 = por %p80, %p81
      %p83 = scmp.ne.s32.totalorder %s69, %s70
      %p84 = scmp.eq.s32.totalorder %s22, 1
      %p85 = por %p83, %p84
      %p87 = scmp.ne.s32.totalorder %s70, %s86
      %p88 = scmp.eq.s32.totalorder %s22, 0
      %p89 = por %p87, %p88
      %s90 = ssub.s32 %s23, %s35
      %p91 = scmp.eq.s32.totalorder %s90, 0
      %s93 = sadd.s32 %s92, 1
      %s94 = scalar_select %p91, %s92, %s93
      %p97 = pneg %p91
      %p98 = scmp.eq.s32.totalorder %s16, 1
      %p99 = por %p97, %p98
      %p100 = scmp.ne.s32.totalorder %s92, %s95
      %p101 = scmp.eq.s32.totalorder %s16, 0
      %p102 = por %p100, %p101
      %p103 = scmp.ne.s32.totalorder %s92, %s95
      %p104 = scmp.eq.s32.totalorder %s21, 1
      %p105 = por %p103, %p104
      %p106 = scmp.ne.s32.totalorder %s95, %s96
      %p107 = scmp.eq.s32.totalorder %s21, 0
      %p108 = por %p106, %p107
      %p109 = scmp.ne.s32.totalorder %s95, %s96
      %p110 = scmp.eq.s32.totalorder %s22, 1
      %p111 = por %p109, %p110
      %p113 = scmp.ne.s32.totalorder %s96, %s112
      %p114 = scmp.eq.s32.totalorder %s22, 0
      %p115 = por %p113, %p114
      %s116 = ssub.s32 %s24, %s31
      %s117 = ssub.s32 %s23, %s35
      %s118 = sor.u32 %s116, %s117
      %p119 = scmp.eq.s32.totalorder %s118, 0
      %s121 = sadd.s32 %s120, 1
      %s122 = scalar_select %p119, %s120, %s121
      %p125 = pneg %p119
      %p126 = scmp.eq.s32.totalorder %s16, 1
      %p127 = por %p125, %p126
      %p128 = scmp.ne.s32.totalorder %s120, %s123
      %p129 = scmp.eq.s32.totalorder %s16, 0
      %p130 = por %p128, %p129
      %p131 = scmp.ne.s32.totalorder %s120, %s123
      %p132 = scmp.eq.s32.totalorder %s21, 1
      %p133 = por %p131, %p132
      %p134 = scmp.ne.s32.totalorder %s123, %s124
      %p135 = scmp.eq.s32.totalorder %s21, 0
      %p136 = por %p134, %p135
      %p137 = scmp.ne.s32.totalorder %s123, %s124
      %p138 = scmp.eq.s32.totalorder %s22, 1
      %p139 = por %p137, %p138
      %p141 = scmp.ne.s32.totalorder %s124, %s140
      %p142 = scmp.eq.s32.totalorder %s22, 0
      %p143 = por %p141, %p142
      %p144 = scmp.le.s32.totalorder 1, %s16
      %p145 = scmp.lt.s32.totalorder %s16, 3
      %p146 = pnand %p144, %p145
      %p147 = pneg %p146
      // Predicated region
      $region9: #{tpu_custom_call.1} parent=5 // pred_check
        _
      $region10: #{tpu_custom_call.1} parent=5 // pred_check_branch
        %149 = sbr.rel (%p146) target = $region12
      $region11: #{tpu_custom_call.1} parent=5 // pred_region
        %s150 = ssub.s32 %s16, 1
        // Predicated region
        $region13: #{tpu_custom_call.1} parent=11 // pred_check
          %p151 = pneg %p82
        $region14: #{tpu_custom_call.1} parent=11 // pred_check_branch
          %153 = sbr.rel (%p151) target = $region16
        $region15: #{tpu_custom_call.1} parent=11 // pred_region
          %155 = vsyncadd [#allocation6], 0
          %s156 = smul.addr %s25, 8
          %s157 = scalar_lea.hbm %s1, %s156
          %s159 = sshll.u32 %s157, 4
          %s160 = int_to_ptr.hbm [resolvable:$true] %s159
          %s161 = sshll.u32 [#allocation5], 4
          %s162 = int_to_ptr.vmem [resolvable:$true] %s161
          %164 = dma.hbm_to_vmem [thread:$0]  %s160, 128, %s162, [#allocation6]
        $region16: #{tpu_custom_call.1} parent=11 // pred_fallthru
          _
        // Predicated region
        $region17: #{tpu_custom_call.1} parent=11 // pred_check
          %p165 = pneg %p108
        $region18: #{tpu_custom_call.1} parent=11 // pred_check_branch
          %167 = sbr.rel (%p165) target = $region20
        $region19: #{tpu_custom_call.1} parent=11 // pred_region
          %169 = vsyncadd [#allocation6], 0
          %s170 = smul.addr %s25, 8
          %s171 = scalar_lea.hbm %s2, %s170
          %s173 = sshll.u32 %s171, 4
          %s174 = int_to_ptr.hbm [resolvable:$true] %s173
          %s175 = sshll.u32 [#allocation7], 4
          %s176 = int_to_ptr.vmem [resolvable:$true] %s175
          %178 = dma.hbm_to_vmem [thread:$0]  %s174, 128, %s176, [#allocation6]
        $region20: #{tpu_custom_call.1} parent=11 // pred_fallthru
          _
      $region12: #{tpu_custom_call.1} parent=5 // pred_fallthru
        _
      %p179 = scmp.lt.s32.totalorder %s16, 2
      // Predicated region
      $region21: #{tpu_custom_call.1} parent=5 // pred_check
        %p180 = pneg %p179
      $region22: #{tpu_custom_call.1} parent=5 // pred_check_branch
        %182 = sbr.rel (%p180) target = $region24
      $region23: #{tpu_custom_call.1} parent=5 // pred_region
        // Predicated region
        $region25: #{tpu_custom_call.1} parent=23 // pred_check
          %p183 = pneg %p50
        $region26: #{tpu_custom_call.1} parent=23 // pred_check_branch
          %185 = sbr.rel (%p183) target = $region28
        $region27: #{tpu_custom_call.1} parent=23 // pred_region
          %s186 = sand.u32 %s40, 1
          %s187 = scalar_lea.sflag [#allocation3], %s186
          %s188 = sand.u32 %s40, 1
          %s189 = smul.addr %s188, 8
          %s190 = scalar_lea.vmem [#allocation2], %s189
          %192 = vsyncadd %s187, 0
          %s193 = sadd.s32 %s23, %s24
          %s194 = smul.addr %s193, 8
          %s195 = scalar_lea.hbm %s0, %s194
          %s197 = sshll.u32 %s195, 4
          %s198 = int_to_ptr.hbm [resolvable:$true] %s197
          %s199 = sshll.u32 %s190, 4
          %s200 = int_to_ptr.vmem [resolvable:$true] %s199
          %202 = dma.hbm_to_vmem [thread:$0]  %s198, 128, %s200, %s187
        $region28: #{tpu_custom_call.1} parent=23 // pred_fallthru
          _
      $region24: #{tpu_custom_call.1} parent=5 // pred_fallthru
        _
      %p203 = scmp.le.s32.totalorder 1, %s16
      %p204 = scmp.lt.s32.totalorder %s16, 3
      %p205 = pnand %p203, %p204
      %p206 = pneg %p205
      // Predicated region
      $region29: #{tpu_custom_call.1} parent=5 // pred_check
        _
      $region30: #{tpu_custom_call.1} parent=5 // pred_check_branch
        %208 = sbr.rel (%p205) target = $region32
      $region31: #{tpu_custom_call.1} parent=5 // pred_region
        %s209 = ssub.s32 %s16, 1
        %s210 = sand.u32 %s43, 1
        %s211 = scalar_lea.sflag [#allocation3], %s210
        %s212 = sand.u32 %s43, 1
        %s213 = smul.addr %s212, 8
        %s214 = scalar_lea.vmem [#allocation2], %s213
        // Predicated region
        $region33: #{tpu_custom_call.1} parent=31 // pred_check
          %p215 = pneg %p56
        $region34: #{tpu_custom_call.1} parent=31 // pred_check_branch
          %217 = sbr.rel (%p215) target = $region36
        $region35: #{tpu_custom_call.1} parent=31 // pred_region
          %219 = dma.done %s211, 128
        $region36: #{tpu_custom_call.1} parent=31 // pred_fallthru
          _
        // Predicated region
        $region37: #{tpu_custom_call.1} parent=31 // pred_check
          %p220 = pneg %p82
        $region38: #{tpu_custom_call.1} parent=31 // pred_check_branch
          %222 = sbr.rel (%p220) target = $region40
        $region39: #{tpu_custom_call.1} parent=31 // pred_region
          %224 = dma.done [#allocation6], 128
        $region40: #{tpu_custom_call.1} parent=31 // pred_fallthru
          _
        // Predicated region
        $region41: #{tpu_custom_call.1} parent=31 // pred_check
          %p225 = pneg %p108
        $region42: #{tpu_custom_call.1} parent=31 // pred_check_branch
          %227 = sbr.rel (%p225) target = $region44
        $region43: #{tpu_custom_call.1} parent=31 // pred_region
          %229 = dma.done [#allocation6], 128
        $region44: #{tpu_custom_call.1} parent=31 // pred_fallthru
          _
        %s230 = sand.u32 %s43, 1
        %s231 = scalar_lea.sflag [#allocation3], %s230
        %s232 = sand.u32 %s43, 1
        %s233 = smul.addr %s232, 8
        %s234 = scalar_lea.vmem [#allocation2], %s233
        %p235 = pneg %p56
        %p236 = pneg %p53
        %p237 = pneg %p82
        %p238 = pneg %p79
        %p239 = pneg %p108
        %p240 = pneg %p105
        %p241 = pneg %p136
        %p242 = pneg %p133
        %s243 = sand.u32 %s123, 1
        %s244 = scalar_lea.sflag [#allocation4], %s243
        %s245 = sand.u32 %s123, 1
        %s246 = smul.addr %s245, 8
        %s247 = scalar_lea.vmem [#allocation8], %s246
        %v248 = vld [vmem:[%s214] sm:$0xff]
        %v249 = vld [vmem:[#allocation5] sm:$0xff]
        %v250 = vld [vmem:[#allocation7] sm:$0xff]
        %v251 = vlaneseq
        %v252 = vand.u32 %v251, 127
        %v253 = vand.u32 %v252, 1
        %vm254 = vcmp.eq.s32.totalorder %v253, 0
        %vm255 = vcmask 1047808
        %256 = vrot.lane.b32.xlu0 %v248, 32
        %v257 = vpop.permute.xlu0 %256
        %v258 = vsel %vm255, %v257, %v248
        %259 = vrot.lane.b32.xlu0 %v258, 32
        %v260 = vpop.permute.xlu0 %259
        %v261 = vsel %vm255, %v260, %v248
        %263 = vrot.lane.b32.xlu0 %v261, 127
        %v264 = vpop.permute.xlu0 %263
        %266 = vrot.lane.b32.xlu0 %v261, 97
        %v267 = vpop.permute.xlu0 %266
        %v269 = vsel %vm254, %v264, %v267
        %v270 = vmul.f32 %v248, %v249
        %v271 = vmul.f32 %v269, %v250
        %v272 = vadd.f32 %v270, %v271
        %vm273 = vcmask 261120
        %274 = vst.msk [vmem:[%s247] sm:$0xff] %vm273, %v272
        %s275 = sand.u32 %s123, 1
        %s276 = scalar_lea.sflag [#allocation4], %s275
        %s277 = sand.u32 %s123, 1
        %s278 = smul.addr %s277, 8
        %s279 = scalar_lea.vmem [#allocation8], %s278
        // Predicated region
        $region45: #{tpu_custom_call.1} parent=31 // pred_check
          %p280 = pneg %p133
        $region46: #{tpu_custom_call.1} parent=31 // pred_check_branch
          %282 = sbr.rel (%p280) target = $region48
        $region47: #{tpu_custom_call.1} parent=31 // pred_region
          %284 = vsyncadd %s276, 0
          %s285 = sadd.s32 %s25, %s26
          %s286 = smul.addr %s285, 8
          %s287 = scalar_lea.hbm %s3, %s286
          %s289 = sshll.u32 %s279, 4
          %s290 = int_to_ptr.vmem [resolvable:$true] %s289
          %s291 = sshll.u32 %s287, 4
          %s292 = int_to_ptr.hbm [resolvable:$true] %s291
          %294 = dma.vmem_to_hbm [thread:$0]  %s290, 128, %s292, %s276
        $region48: #{tpu_custom_call.1} parent=31 // pred_fallthru
          _
      $region32: #{tpu_custom_call.1} parent=5 // pred_fallthru
        _
      %p295 = scmp.le.s32.totalorder 2, %s16
      // Predicated region
      $region49: #{tpu_custom_call.1} parent=5 // pred_check
        %p296 = pneg %p295
      $region50: #{tpu_custom_call.1} parent=5 // pred_check_branch
        %298 = sbr.rel (%p296) target = $region52
      $region51: #{tpu_custom_call.1} parent=5 // pred_region
        %s299 = ssub.s32 %s16, 2
        // Predicated region
        $region53: #{tpu_custom_call.1} parent=51 // pred_check
          %p300 = pneg %p139
        $region54: #{tpu_custom_call.1} parent=51 // pred_check_branch
          %302 = sbr.rel (%p300) target = $region56
        $region55: #{tpu_custom_call.1} parent=51 // pred_region
          %s303 = sand.u32 %s124, 1
          %s304 = scalar_lea.sflag [#allocation4], %s303
          %s305 = sand.u32 %s124, 1
          %s306 = smul.addr %s305, 8
          %s307 = scalar_lea.vmem [#allocation8], %s306
          %309 = dma.done %s304, 128
        $region56: #{tpu_custom_call.1} parent=51 // pred_fallthru
          _
      $region52: #{tpu_custom_call.1} parent=5 // pred_fallthru
        _
    $region6: #{tpu_custom_call.1} parent=1 // loop_footer
      %s20 = sadd.s32 1, %s16
    $region7: #{tpu_custom_call.1} parent=1 // loop_footer_branch
      %15 = sbr.rel target = $region3
    $region8: #{tpu_custom_call.1} parent=1 // loop_exit
      _
    %310 = vsyncpa [#allocation3], 1
    %s311 = scalar_lea.sflag [#allocation3], 1
    %312 = vsyncpa %s311, 1
    %313 = vsyncpa [#allocation6], 1
    %314 = vsyncpa [#allocation4], 1
    %s315 = scalar_lea.sflag [#allocation4], 1
    %316 = vsyncpa %s315, 1

</llo_original>
